<compile_context>
chip_gen: v6e
topology: v6e:2x2x1
jax: 0.10.0
libtpu: 0.0.40
codegen_flags: <defaults>
</compile_context>

<pallas_src>
import jax
import jax.numpy as jnp
from jax.experimental import pallas as pl
from jax.experimental.pallas import tpu as pltpu


NEG_SLOPE = 0.01   # F.leaky_relu default
IN_DIM = 55        # observation features


def _round_up(n, m):
    return ((n + m - 1) // m) * m


def critic_kernel(x_ref, w12_ref, b12_ref, w3_ref, b3_ref, o_ref):
    # Fused (first_layer o hidden_layers[0]): single MXU matmul, bf16 operands,
    # f32 accumulation.  x tile is loaded f32 and cast in-kernel.
    xb = x_ref[...].astype(jnp.bfloat16)                       # (TB, 55)
    h = jnp.dot(xb, w12_ref[...], preferred_element_type=jnp.float32)
    h = h + b12_ref[...]                                        # (TB, H) f32

    # leaky_relu (f32 on the VPU).
    h = jnp.where(h >= 0.0, h, NEG_SLOPE * h)

    # final_layer: Linear(H -> 1) as a VPU multiply + cross-lane reduce; the
    # result is packed along lanes so the output store is lane-dense.
    row = jnp.sum(h * w3_ref[...], axis=-1)                     # (TB,)
    o_ref[...] = (row[None, :] + b3_ref[...]).astype(o_ref.dtype)   # (1, TB)


def init_params(key, in_dim=IN_DIM, hidden=64):
    """Deterministic init mimicking nn.Linear (uniform +/- 1/sqrt(fan_in)).

    Weights are stored as (in_features, out_features) so math is x @ W + b
    (PyTorch stores (out, in); the transpose is folded in here).
    """
    def linear(k, fan_in, fan_out):
        kw, kb = jax.random.split(k)
        bound = 1.0 / jnp.sqrt(fan_in)
        w = jax.random.uniform(kw, (fan_in, fan_out), jnp.float32, -bound, bound)
        b = jax.random.uniform(kb, (1, fan_out), jnp.float32, -bound, bound)
        return w, b

    k1, k2, k3 = jax.random.split(key, 3)
    w1, b1 = linear(k1, in_dim, hidden)
    w2, b2 = linear(k2, hidden, hidden)
    w3, b3 = linear(k3, hidden, 1)
    return w1, b1, w2, b2, w3, b3


def prepare_params(params):
    """Fuse layer1+layer2 (no activation between them) and lay out for the kernel."""
    w1, b1, w2, b2, w3, b3 = params
    hidden = w2.shape[1]
    hp = jax.lax.Precision.HIGHEST
    w12 = jnp.dot(w1, w2, precision=hp)                          # (55, H) f32
    b12 = jnp.dot(b1.reshape(1, -1), w2, precision=hp) + b2.reshape(1, -1)
    return (
        w12.astype(jnp.bfloat16),                                # (55, H) bf16 (MXU)
        b12.astype(jnp.float32),                                 # (1, H)  f32
        w3.reshape(1, hidden).astype(jnp.float32),               # (1, H)  f32 row
        b3.reshape(1, 1).astype(jnp.float32),                    # (1, 1)  f32
    )


def critic_forward(x, prepared, *, tile_b=2048):
    w12, b12, w3, b3 = prepared
    in_dim, hidden = w12.shape
    batch = x.shape[0]

    # Tile the batch: big tiles amortize per-grid-step overhead, but cap so the
    # grid has >= 2 steps when possible (v7x megacore) and never exceeds the
    # 8-row-aligned batch for tiny inputs.
    tile_b = max(8, min(tile_b, _round_up(pl.cdiv(batch, 2), 8)))
    nb = pl.cdiv(batch, tile_b)
    b_pad = nb * tile_b
    if b_pad != batch:
        # Batch-tail zero pad only (no feature padding / dtype copy of x).
        x = jnp.pad(x, ((0, b_pad - batch), (0, 0)))

    out = pl.pallas_call(
        critic_kernel,
        out_shape=jax.ShapeDtypeStruct((nb, 1, tile_b), jnp.float32),
        grid_spec=pltpu.PrefetchScalarGridSpec(
            num_scalar_prefetch=0,
            grid=(nb,),
            in_specs=[
                pl.BlockSpec((tile_b, in_dim), lambda i: (i, 0)),   # x tile (streamed)
                pl.BlockSpec((in_dim, hidden), lambda i: (0, 0)),   # fused W12 (resident)
                pl.BlockSpec((1, hidden), lambda i: (0, 0)),        # fused b12
                pl.BlockSpec((1, hidden), lambda i: (0, 0)),        # w3 row
                pl.BlockSpec((1, 1), lambda i: (0, 0)),             # b3
            ],
            out_specs=pl.BlockSpec((None, 1, tile_b), lambda i: (i, 0, 0)),
        ),
        compiler_params=pltpu.CompilerParams(
            dimension_semantics=("parallel",),
        ),
    )(x, w12, b12, w3, b3)

    # Lane-dense (nb, 1, tile_b) -> (batch, 1); padded tail rows are dropped.
    return out.reshape(b_pad, 1)[:batch]


def reference_forward_f32(x, params):
    """True float32 forward of the PyTorch module (unfused)."""
    w1, b1, w2, b2, w3, b3 = params
    hp = jax.lax.Precision.HIGHEST
    h = jnp.dot(x, w1, precision=hp) + b1
    h = jnp.dot(h, w2, precision=hp) + b2
    h = jnp.where(h >= 0.0, h, NEG_SLOPE * h)
    return jnp.dot(h, w3, precision=hp) + b3


def reference_forward_mirror(x, prepared):
    """Reference mirroring the kernel's fused math and bf16 MXU rounding."""
    w12, b12, w3, b3 = prepared
    hp = jax.lax.Precision.HIGHEST
    rb = lambda a: a.astype(jnp.bfloat16).astype(jnp.float32)
    h = jnp.dot(rb(x), w12.astype(jnp.float32), precision=hp) + b12
    h = jnp.where(h >= 0.0, h, NEG_SLOPE * h)
    return jnp.dot(h, w3.reshape(-1, 1), precision=hp) + b3.reshape(1, 1)


if __name__ == "__main__":
    key = jax.random.PRNGKey(0)
    kp, kx = jax.random.split(key)

    hidden = 64          # hidden_dimension default in Critic.__init__
    batch = 12           # small batch; exercises 2 grid steps + tail padding
    params = init_params(kp, in_dim=IN_DIM, hidden=hidden)
    x = jax.random.normal(kx, (batch, IN_DIM), jnp.float32)

    prepared = prepare_params(params)
    out = critic_forward(x, prepared)
    out = jax.block_until_ready(out)
    assert out.shape == (batch, 1), out.shape

    # Tight check vs. a reference mirroring the kernel's bf16 MXU rounding.
    ref_m = reference_forward_mirror(x, prepared)
    assert jnp.allclose(out, ref_m, atol=1e-3, rtol=1e-3), (out, ref_m)

    # Loose sanity check vs. the true float32 module semantics.
    ref_f = reference_forward_f32(x, params)
    assert jnp.allclose(out, ref_f, atol=5e-2, rtol=5e-2), (out, ref_f)

    print("KERNEL_OK")
</pallas_src>

<mosaic_0001>
module attributes {stable_mosaic.version = 11 : i64} {
  func.func @critic_kernel(%arg0: i32, %arg1: memref<8x55xf32, #tpu.memory_space<vmem>>, %arg2: memref<55x64xbf16, #tpu.memory_space<vmem>>, %arg3: memref<1x64xf32, #tpu.memory_space<vmem>>, %arg4: memref<1x64xf32, #tpu.memory_space<vmem>>, %arg5: memref<1x1xf32, #tpu.memory_space<vmem>>, %arg6: memref<1x1x8xf32, #tpu.memory_space<vmem>>) attributes {dimension_semantics = [#tpu.dimension_semantics<parallel>], iteration_bounds = array<i64: 2>, scalar_prefetch = 0 : i64, scratch_operands = 0 : i64, tpu.core_type = #tpu.core_type<tc>, window_params = [{transform_indices = @transform_0, window_bounds = array<i64: 8, 55>}, {pipeline_mode = #tpu.pipeline_mode<synchronous>, transform_indices = @transform_1, window_bounds = array<i64: 55, 64>}, {pipeline_mode = #tpu.pipeline_mode<synchronous>, transform_indices = @transform_2, window_bounds = array<i64: 1, 64>}, {pipeline_mode = #tpu.pipeline_mode<synchronous>, transform_indices = @transform_3, window_bounds = array<i64: 1, 64>}, {pipeline_mode = #tpu.pipeline_mode<synchronous>, transform_indices = @transform_4, window_bounds = array<i64: 1, 1>}, {transform_indices = @transform_5, window_bounds = array<i64: 1, 1, 8>}]} {
    %c0 = arith.constant 0 : index
    %c0_0 = arith.constant 0 : index
    %0 = vector.load %arg1[%c0, %c0_0] : memref<8x55xf32, #tpu.memory_space<vmem>>, vector<8x55xf32>
    %1 = arith.truncf %0 : vector<8x55xf32> to vector<8x55xbf16>
    %c0_1 = arith.constant 0 : index
    %c0_2 = arith.constant 0 : index
    %2 = vector.load %arg2[%c0_1, %c0_2] : memref<55x64xbf16, #tpu.memory_space<vmem>>, vector<55x64xbf16>
    %cst = arith.constant dense<0.000000e+00> : vector<8x64xf32>
    %3 = tpu.matmul %1, %2, %cst {dimension_numbers = #tpu.dot_dimension_numbers<[1], [0], [0], [1], [0, 0, 1, 1], [], []>} : vector<8x55xbf16>, vector<55x64xbf16>, vector<8x64xf32> -> vector<8x64xf32>
    %c0_3 = arith.constant 0 : index
    %c0_4 = arith.constant 0 : index
    %4 = vector.load %arg3[%c0_3, %c0_4] : memref<1x64xf32, #tpu.memory_space<vmem>>, vector<1x64xf32>
    %5 = vector.broadcast %4 : vector<1x64xf32> to vector<8x64xf32>
    %6 = arith.addf %3, %5 : vector<8x64xf32>
    %cst_5 = arith.constant 0.000000e+00 : f32
    %7 = vector.broadcast %cst_5 : f32 to vector<8x64xf32>
    %8 = arith.cmpf oge, %6, %7 : vector<8x64xf32>
    %cst_6 = arith.constant 0.00999999977 : f32
    %9 = vector.broadcast %cst_6 : f32 to vector<8x64xf32>
    %10 = arith.mulf %9, %6 : vector<8x64xf32>
    %11 = arith.select %8, %6, %10 : vector<8x64xi1>, vector<8x64xf32>
    %c0_7 = arith.constant 0 : index
    %c0_8 = arith.constant 0 : index
    %12 = vector.load %arg4[%c0_7, %c0_8] : memref<1x64xf32, #tpu.memory_space<vmem>>, vector<1x64xf32>
    %13 = vector.broadcast %12 : vector<1x64xf32> to vector<8x64xf32>
    %14 = arith.mulf %11, %13 : vector<8x64xf32>
    %cst_9 = arith.constant dense<0.000000e+00> : vector<8xf32>
    %15 = vector.multi_reduction <add>, %14, %cst_9 [1] : vector<8x64xf32> to vector<8xf32>
    %16 = vector.shape_cast %15 : vector<8xf32> to vector<1x8xf32>
    %c0_10 = arith.constant 0 : index
    %c0_11 = arith.constant 0 : index
    %17 = vector.load %arg5[%c0_10, %c0_11] : memref<1x1xf32, #tpu.memory_space<vmem>>, vector<1x1xf32>
    %18 = vector.broadcast %17 : vector<1x1xf32> to vector<1x8xf32>
    %19 = arith.addf %16, %18 : vector<1x8xf32>
    %c0_12 = arith.constant 0 : index
    %c0_13 = arith.constant 0 : index
    %c0_14 = arith.constant 0 : index
    %20 = vector.load %arg6[%c0_12, %c0_13, %c0_14] : memref<1x1x8xf32, #tpu.memory_space<vmem>>, vector<1x1x8xf32>
    %21 = vector.shape_cast %20 : vector<1x1x8xf32> to vector<1x8xf32>
    %22 = vector.shape_cast %19 : vector<1x8xf32> to vector<1x1x8xf32>
    tpu.vector_store %arg6[%c0_12, %c0_13, %c0_14], %22 {strides = array<i32>} : memref<1x1x8xf32, #tpu.memory_space<vmem>>, vector<1x1x8xf32>,
    return
  }
  func.func @transform_0(%arg0: i32) -> (i32, i32) {
    %c0_i32 = arith.constant 0 : i32
    %c0_i32_0 = arith.constant 0 : i32
    return %arg0, %c0_i32 : i32, i32
  }
  func.func @transform_1(%arg0: i32) -> (i32, i32) {
    %c0_i32 = arith.constant 0 : i32
    %c0_i32_0 = arith.constant 0 : i32
    %c0_i32_1 = arith.constant 0 : i32
    return %c0_i32, %c0_i32_0 : i32, i32
  }
  func.func @transform_2(%arg0: i32) -> (i32, i32) {
    %c0_i32 = arith.constant 0 : i32
    %c0_i32_0 = arith.constant 0 : i32
    %c0_i32_1 = arith.constant 0 : i32
    return %c0_i32, %c0_i32_0 : i32, i32
  }
  func.func @transform_3(%arg0: i32) -> (i32, i32) {
    %c0_i32 = arith.constant 0 : i32
    %c0_i32_0 = arith.constant 0 : i32
    %c0_i32_1 = arith.constant 0 : i32
    return %c0_i32, %c0_i32_0 : i32, i32
  }
  func.func @transform_4(%arg0: i32) -> (i32, i32) {
    %c0_i32 = arith.constant 0 : i32
    %c0_i32_0 = arith.constant 0 : i32
    %c0_i32_1 = arith.constant 0 : i32
    return %c0_i32, %c0_i32_0 : i32, i32
  }
  func.func @transform_5(%arg0: i32) -> (i32, i32, i32) {
    %c0_i32 = arith.constant 0 : i32
    %c0_i32_0 = arith.constant 0 : i32
    %c0_i32_1 = arith.constant 0 : i32
    return %arg0, %c0_i32, %c0_i32_0 : i32, i32, i32
  }
}

</mosaic_0001>

<llo_original>
// kernel: tpu_custom_call.1
$region0: #{tpu_custom_call.1}
  #allocation0 [shape = 'u32[]', space=smem, size = 0x4, offset = 0x4, fixed_abs, tag = 'smem constant byte address 0x4 - core index']
  #allocation1 [shape = 'u32[144,128]{1,0:T(1,128)}', space=vmem, size = 0x12000, scoped, tag = 'internal scratch']
  #allocation2 [shape = 'f32[1,1]{1,0:T(1,128)S(1)}', space=vmem, size = 0x200, scoped, tag = 'scoped memory for tpu_custom_call.1']
  %s0 = inlined_call_operand.hbm [shape: f32[16,55], index: 0, kind: input, shape index: {}]
  %s1 = inlined_call_operand.hbm [shape: bf16[55,64], index: 1, kind: input, shape index: {}]
  %s2 = inlined_call_operand.vmem [shape: f32[1,64], index: 2, kind: input, shape index: {}]
  %s3 = inlined_call_operand.vmem [shape: f32[1,64], index: 3, kind: input, shape index: {}]
  %s4 = inlined_call_operand.<no memory space> [shape: f32[1,1], index: 4, kind: input, shape index: {}]
  %s5 = inlined_call_operand.hbm [shape: f32[2,1,8], index: 5, kind: output, shape index: {}]
  %s6 = sld [smem:[#allocation0]]
  $region61: #{tpu_custom_call.1} parent=0
    _
  %s8 = ssub.s32 1, %s6
  %s9 = scalar_select 0, %s8, %s6
  %v10 = vstv %s4
  %11 = vst [vmem:[#allocation2] sm:$0x1] %v10
  $region1: #{tpu_custom_call.1} parent=0
    #allocation3 [shape = 'u8[8192]{0}', space=vmem, size = 0x2000, scoped, tag = 'input window, operand 0']
    #allocation4 [shape = 's32[2]{0}', space=sflag, size = 0x8, scoped, tag = 'scoped memory for tpu_custom_call.1']
    #allocation5 [shape = 's32[2]{0}', space=sflag, size = 0x8, scoped, tag = 'scoped memory for tpu_custom_call.1']
    #allocation6 [shape = 'u8[14336]{0}', space=vmem, size = 0x3800, scoped, tag = 'input window, operand 1, single buffered']
    #allocation7 [shape = 's32[1]{0}', space=sflag, size = 0x4, scoped, tag = 'scoped memory for tpu_custom_call.1']
    #allocation8 [shape = 'u8[1024]{0}', space=vmem, size = 0x400, scoped, tag = 'output window, operand 0']
    %12 = vsyncpa [#allocation4], 0
    %s13 = scalar_lea.sflag [#allocation4], 1
    %14 = vsyncpa %s13, 0
    %15 = vsyncpa [#allocation7], 0
    %16 = vsyncpa [#allocation5], 0
    %s17 = scalar_lea.sflag [#allocation5], 1
    %18 = vsyncpa %s17, 0
    loop: start=0, step=1, limit=4
    $region2: #{tpu_custom_call.1} parent=1 // loop_pre_header
      _
    $region3: #{tpu_custom_call.1} parent=1 // loop_header
      %s20 = sphi 0, %s24
      %p21 = scmp.ge.s32.totalorder %s20, 4
      %s30 = sphi 0, %s32
      %s33 = sphi 0, %s30
      %s34 = sphi 0, %s33
      %s50 = sphi 0, %s34
      %s54 = sphi 0, %s54
      %s56 = sphi 0, %s54
      %s57 = sphi 0, %s56
      %s71 = sphi 0, %s57
      %s75 = sphi 0, %s75
      %s77 = sphi 0, %s75
      %s78 = sphi 0, %s77
      %s92 = sphi 0, %s78
      %s96 = sphi 0, %s96
      %s98 = sphi 0, %s96
      %s99 = sphi 0, %s98
      %s113 = sphi 0, %s99
      %s117 = sphi 0, %s117
      %s119 = sphi 0, %s117
      %s120 = sphi 0, %s119
      %s134 = sphi 0, %s120
      %s140 = sphi 0, %s142
      %s143 = sphi 0, %s140
      %s144 = sphi 0, %s143
      %s160 = sphi 0, %s144
    $region4: #{tpu_custom_call.1} parent=1 // loop_header_branch
      %23 = sbr.rel (%p21) target = $region8
    $region5: #{tpu_custom_call.1} parent=1 // loop_body
      %s25 = ssub.s32 %s20, 1
      %s26 = ssub.s32 %s20, 2
      %s27 = sadd.s32 %s20, 1
      %s28 = ssub.s32 %s20, %s27
      %p29 = scmp.eq.s32.totalorder %s28, 0
      %s31 = sadd.s32 %s30, 1
      %s32 = scalar_select %p29, %s30, %s31
      %p35 = pneg %p29
      %p36 = scmp.eq.s32.totalorder %s20, 1
      %p37 = por %p35, %p36
      %p38 = scmp.ne.s32.totalorder %s30, %s33
      %p39 = scmp.eq.s32.totalorder %s20, 0
      %p40 = por %p38, %p39
      %p41 = scmp.ne.s32.totalorder %s30, %s33
      %p42 = scmp.eq.s32.totalorder %s25, 1
      %p43 = por %p41, %p42
      %p44 = scmp.ne.s32.totalorder %s33, %s34
      %p45 = scmp.eq.s32.totalorder %s25, 0
      %p46 = por %p44, %p45
      %p47 = scmp.ne.s32.totalorder %s33, %s34
      %p48 = scmp.eq.s32.totalorder %s26, 1
      %p49 = por %p47, %p48
      %p51 = scmp.ne.s32.totalorder %s34, %s50
      %p52 = scmp.eq.s32.totalorder %s26, 0
      %p53 = por %p51, %p52
      %s55 = sadd.s32 %s54, 1
      %p58 = scmp.eq.s32.totalorder %s20, 1
      %p59 = scmp.ne.s32.totalorder %s54, %s56
      %p60 = scmp.eq.s32.totalorder %s20, 0
      %p61 = por %p59, %p60
      %p62 = scmp.ne.s32.totalorder %s54, %s56
      %p63 = scmp.eq.s32.totalorder %s25, 1
      %p64 = por %p62, %p63
      %p65 = scmp.ne.s32.totalorder %s56, %s57
      %p66 = scmp.eq.s32.totalorder %s25, 0
      %p67 = por %p65, %p66
      %p68 = scmp.ne.s32.totalorder %s56, %s57
      %p69 = scmp.eq.s32.totalorder %s26, 1
      %p70 = por %p68, %p69
      %p72 = scmp.ne.s32.totalorder %s57, %s71
      %p73 = scmp.eq.s32.totalorder %s26, 0
      %p74 = por %p72, %p73
      %s76 = sadd.s32 %s75, 1
      %p79 = scmp.eq.s32.totalorder %s20, 1
      %p80 = scmp.ne.s32.totalorder %s75, %s77
      %p81 = scmp.eq.s32.totalorder %s20, 0
      %p82 = por %p80, %p81
      %p83 = scmp.ne.s32.totalorder %s75, %s77
      %p84 = scmp.eq.s32.totalorder %s25, 1
      %p85 = por %p83, %p84
      %p86 = scmp.ne.s32.totalorder %s77, %s78
      %p87 = scmp.eq.s32.totalorder %s25, 0
      %p88 = por %p86, %p87
      %p89 = scmp.ne.s32.totalorder %s77, %s78
      %p90 = scmp.eq.s32.totalorder %s26, 1
      %p91 = por %p89, %p90
      %p93 = scmp.ne.s32.totalorder %s78, %s92
      %p94 = scmp.eq.s32.totalorder %s26, 0
      %p95 = por %p93, %p94
      %s97 = sadd.s32 %s96, 1
      %p100 = scmp.eq.s32.totalorder %s20, 1
      %p101 = scmp.ne.s32.totalorder %s96, %s98
      %p102 = scmp.eq.s32.totalorder %s20, 0
      %p103 = por %p101, %p102
      %p104 = scmp.ne.s32.totalorder %s96, %s98
      %p105 = scmp.eq.s32.totalorder %s25, 1
      %p106 = por %p104, %p105
      %p107 = scmp.ne.s32.totalorder %s98, %s99
      %p108 = scmp.eq.s32.totalorder %s25, 0
      %p109 = por %p107, %p108
      %p110 = scmp.ne.s32.totalorder %s98, %s99
      %p111 = scmp.eq.s32.totalorder %s26, 1
      %p112 = por %p110, %p111
      %p114 = scmp.ne.s32.totalorder %s99, %s113
      %p115 = scmp.eq.s32.totalorder %s26, 0
      %p116 = por %p114, %p115
      %s118 = sadd.s32 %s117, 1
      %p121 = scmp.eq.s32.totalorder %s20, 1
      %p122 = scmp.ne.s32.totalorder %s117, %s119
      %p123 = scmp.eq.s32.totalorder %s20, 0
      %p124 = por %p122, %p123
      %p125 = scmp.ne.s32.totalorder %s117, %s119
      %p126 = scmp.eq.s32.totalorder %s25, 1
      %p127 = por %p125, %p126
      %p128 = scmp.ne.s32.totalorder %s119, %s120
      %p129 = scmp.eq.s32.totalorder %s25, 0
      %p130 = por %p128, %p129
      %p131 = scmp.ne.s32.totalorder %s119, %s120
      %p132 = scmp.eq.s32.totalorder %s26, 1
      %p133 = por %p131, %p132
      %p135 = scmp.ne.s32.totalorder %s120, %s134
      %p136 = scmp.eq.s32.totalorder %s26, 0
      %p137 = por %p135, %p136
      %s138 = ssub.s32 %s20, %s27
      %p139 = scmp.eq.s32.totalorder %s138, 0
      %s141 = sadd.s32 %s140, 1
      %s142 = scalar_select %p139, %s140, %s141
      %p145 = pneg %p139
      %p146 = scmp.eq.s32.totalorder %s20, 1
      %p147 = por %p145, %p146
      %p148 = scmp.ne.s32.totalorder %s140, %s143
      %p149 = scmp.eq.s32.totalorder %s20, 0
      %p150 = por %p148, %p149
      %p151 = scmp.ne.s32.totalorder %s140, %s143
      %p152 = scmp.eq.s32.totalorder %s25, 1
      %p153 = por %p151, %p152
      %p154 = scmp.ne.s32.totalorder %s143, %s144
      %p155 = scmp.eq.s32.totalorder %s25, 0
      %p156 = por %p154, %p155
      %p157 = scmp.ne.s32.totalorder %s143, %s144
      %p158 = scmp.eq.s32.totalorder %s26, 1
      %p159 = por %p157, %p158
      %p161 = scmp.ne.s32.totalorder %s144, %s160
      %p162 = scmp.eq.s32.totalorder %s26, 0
      %p163 = por %p161, %p162
      %p164 = scmp.le.s32.totalorder 1, %s20
      %p165 = scmp.lt.s32.totalorder %s20, 3
      %p166 = pnand %p164, %p165
      %p167 = pneg %p166
      // Predicated region
      $region9: #{tpu_custom_call.1} parent=5 // pred_check
        _
      $region10: #{tpu_custom_call.1} parent=5 // pred_check_branch
        %169 = sbr.rel (%p166) target = $region12
      $region11: #{tpu_custom_call.1} parent=5 // pred_region
        %s170 = ssub.s32 %s20, 1
        // Predicated region
        $region13: #{tpu_custom_call.1} parent=11 // pred_check
          %p171 = pneg %p67
        $region14: #{tpu_custom_call.1} parent=11 // pred_check_branch
          %173 = sbr.rel (%p171) target = $region16
        $region15: #{tpu_custom_call.1} parent=11 // pred_region
          %s175 = ssub.s32 448, 448
          %176 = vsyncadd [#allocation7], %s175
          %s177 = sshll.u32 [#allocation6], 4
          %s178 = int_to_ptr.vmem [resolvable:$true] %s177
          %183 = dma.hbm_to_vmem [thread:$0]  %s1, 448, %s178, [#allocation7], 64, 64, 4
        $region16: #{tpu_custom_call.1} parent=11 // pred_fallthru
          _
        // Predicated region
        $region17: #{tpu_custom_call.1} parent=11 // pred_check
          %p184 = pneg %p88
        $region18: #{tpu_custom_call.1} parent=11 // pred_check_branch
          %186 = sbr.rel (%p184) target = $region20
        $region19: #{tpu_custom_call.1} parent=11 // pred_region
          _
        $region20: #{tpu_custom_call.1} parent=11 // pred_fallthru
          _
        // Predicated region
        $region21: #{tpu_custom_call.1} parent=11 // pred_check
          %p187 = pneg %p109
        $region22: #{tpu_custom_call.1} parent=11 // pred_check_branch
          %189 = sbr.rel (%p187) target = $region24
        $region23: #{tpu_custom_call.1} parent=11 // pred_region
          _
        $region24: #{tpu_custom_call.1} parent=11 // pred_fallthru
          _
        // Predicated region
        $region25: #{tpu_custom_call.1} parent=11 // pred_check
          %p190 = pneg %p130
        $region26: #{tpu_custom_call.1} parent=11 // pred_check_branch
          %192 = sbr.rel (%p190) target = $region28
        $region27: #{tpu_custom_call.1} parent=11 // pred_region
          _
        $region28: #{tpu_custom_call.1} parent=11 // pred_fallthru
          _
      $region12: #{tpu_custom_call.1} parent=5 // pred_fallthru
        _
      %p193 = scmp.lt.s32.totalorder %s20, 2
      // Predicated region
      $region29: #{tpu_custom_call.1} parent=5 // pred_check
        %p194 = pneg %p193
      $region30: #{tpu_custom_call.1} parent=5 // pred_check_branch
        %196 = sbr.rel (%p194) target = $region32
      $region31: #{tpu_custom_call.1} parent=5 // pred_region
        // Predicated region
        $region33: #{tpu_custom_call.1} parent=31 // pred_check
          %p197 = pneg %p40
        $region34: #{tpu_custom_call.1} parent=31 // pred_check_branch
          %199 = sbr.rel (%p197) target = $region36
        $region35: #{tpu_custom_call.1} parent=31 // pred_region
          %s200 = sand.u32 %s30, 1
          %s201 = scalar_lea.sflag [#allocation4], %s200
          %s202 = sand.u32 %s30, 1
          %s203 = smul.addr %s202, 8
          %s204 = scalar_lea.vmem [#allocation3], %s203
          %s206 = ssub.s32 128, 128
          %207 = vsyncadd %s201, %s206
          %s208 = smul.addr %s20, 128
          %s209 = scalar_lea.hbm %s0, %s208
          %s211 = sshll.u32 %s204, 4
          %s212 = int_to_ptr.vmem [resolvable:$true] %s211
          %214 = dma.hbm_to_vmem [thread:$0]  %s209, 128, %s212, %s201
        $region36: #{tpu_custom_call.1} parent=31 // pred_fallthru
          _
      $region32: #{tpu_custom_call.1} parent=5 // pred_fallthru
        _
      %p215 = scmp.le.s32.totalorder 1, %s20
      %p216 = scmp.lt.s32.totalorder %s20, 3
      %p217 = pnand %p215, %p216
      %p218 = pneg %p217
      // Predicated region
      $region37: #{tpu_custom_call.1} parent=5 // pred_check
        _
      $region38: #{tpu_custom_call.1} parent=5 // pred_check_branch
        %220 = sbr.rel (%p217) target = $region40
      $region39: #{tpu_custom_call.1} parent=5 // pred_region
        %s221 = ssub.s32 %s20, 1
        %s222 = sand.u32 %s33, 1
        %s223 = scalar_lea.sflag [#allocation4], %s222
        %s224 = sand.u32 %s33, 1
        %s225 = smul.addr %s224, 8
        %s226 = scalar_lea.vmem [#allocation3], %s225
        // Predicated region
        $region41: #{tpu_custom_call.1} parent=39 // pred_check
          %p227 = pneg %p46
        $region42: #{tpu_custom_call.1} parent=39 // pred_check_branch
          %229 = sbr.rel (%p227) target = $region44
        $region43: #{tpu_custom_call.1} parent=39 // pred_region
          %230 = dma.done %s223, 128
        $region44: #{tpu_custom_call.1} parent=39 // pred_fallthru
          _
        // Predicated region
        $region45: #{tpu_custom_call.1} parent=39 // pred_check
          %p231 = pneg %p67
        $region46: #{tpu_custom_call.1} parent=39 // pred_check_branch
          %233 = sbr.rel (%p231) target = $region48
        $region47: #{tpu_custom_call.1} parent=39 // pred_region
          %234 = dma.done [#allocation7], 448
        $region48: #{tpu_custom_call.1} parent=39 // pred_fallthru
          _
        %s235 = sand.u32 %s33, 1
        %s236 = scalar_lea.sflag [#allocation4], %s235
        %s237 = sand.u32 %s33, 1
        %s238 = smul.addr %s237, 8
        %s239 = scalar_lea.vmem [#allocation3], %s238
        %p240 = pneg %p46
        %p241 = pneg %p43
        %p242 = pneg %p67
        %p243 = pneg %p64
        %p244 = pneg %p88
        %p245 = pneg %p85
        %p246 = pneg %p109
        %p247 = pneg %p106
        %p248 = pneg %p130
        %p249 = pneg %p127
        %p250 = pneg %p156
        %p251 = pneg %p153
        %s252 = sand.u32 %s143, 1
        %s253 = scalar_lea.sflag [#allocation5], %s252
        %s254 = sand.u32 %s143, 1
        %s255 = scalar_lea.vmem [#allocation8], %s254
        %v257 = vld [vmem:[%s226] sm:$0xff]
        %v258 = vpack.c.bf16 %v257, %v257
        %v259 = vld [vmem:[#allocation6] sm:$0xf]
        %v260 = vld [vmem:[#allocation6 + $0x4] sm:$0xf]
        %v261 = vld [vmem:[#allocation6 + $0x8] sm:$0xf]
        %v262 = vld [vmem:[#allocation6 + $0xc] sm:$0xf]
        %v263 = vld [vmem:[#allocation6 + $0x10] sm:$0xf]
        %v264 = vld [vmem:[#allocation6 + $0x14] sm:$0xf]
        %v265 = vld [vmem:[#allocation6 + $0x18] sm:$0xf]
        %v266 = vld [vmem:[%s2] sm:$0x1]
        %v268 = vlaneseq
        %v269 = vshrl.u32 %v268, 7
        %v270 = vsub.s32 0, %v269
        %v271 = vrot.slane %v266, %v270
        %v280 = vunpack.c.l.b16 %v259
        %v281 = vunpack.c.l.b16 %v260
        %v282 = vunpack.c.l.b16 %v261
        %v283 = vunpack.c.l.b16 %v262
        %v284 = vunpack.c.l.b16 %v263
        %v285 = vunpack.c.l.b16 %v264
        %v286 = vunpack.c.l.b16 %v265
        %v287 = vpack.c.b16 %v281, %v280
        %v288 = vpack.c.b16 %v283, %v282
        %v289 = vpack.c.b16 %v285, %v284
        %v290 = vpack.c.b16 %v286, %v286
        %vm294 = vcmask 449536
        %v296 = vsel %vm294, %v258, 0
        %vm298 = vcmask 1042432
        %vm299 = vcmask 1043456
        %v300 = vsel %vm298, 4294967295, 65535
        %v301 = vsel %vm299, %v300, 0
        %v303 = vand.u32 %v290, %v301
        %305 = vmatprep.subr.bf16.mxu0 0
        %306 = vmatpush1.bf16.msra.mxu0 0
        %307 = vmatprep.subr.bf16.mxu0 0
        %308 = vmatpush1.bf16.msra.mxu0 0
        %309 = vmatprep.subr.bf16.mxu0 0
        %310 = vmatpush1.bf16.msra.mxu0 0
        %311 = vmatprep.subr.bf16.mxu0 0
        %312 = vmatpush1.bf16.msra.mxu0 0
        %313 = vmatprep.subr.bf16.mxu0 0
        %314 = vmatpush1.bf16.msra.mxu0 %v303
        %315 = vmatprep.subr.bf16.mxu0 0
        %316 = vmatpush1.bf16.msra.mxu0 %v289
        %317 = vmatprep.subr.bf16.mxu0 0
        %318 = vmatpush1.bf16.msra.mxu0 %v288
        %319 = vmatprep.subr.bf16.mxu0 0
        %320 = vmatpush1.bf16.msra.mxu0 %v287
        %321 = vmatprep.subr.bf16.mxu0 0
        %322 = vmatpush2.bf16.msra.mxu0 0
        %323 = vmatprep.subr.bf16.mxu0 0
        %324 = vmatpush2.bf16.msra.mxu0 0
        %325 = vmatprep.subr.bf16.mxu0 0
        %326 = vmatpush2.bf16.msra.mxu0 0
        %327 = vmatprep.subr.bf16.mxu0 0
        %328 = vmatpush2.bf16.msra.mxu0 0
        %329 = vmatprep.subr.bf16.mxu0 0
        %330 = vmatpush2.bf16.msra.mxu0 0
        %331 = vmatprep.subr.bf16.mxu0 0
        %332 = vmatpush2.bf16.msra.mxu0 0
        %333 = vmatprep.subr.bf16.mxu0 0
        %334 = vmatpush2.bf16.msra.mxu0 0
        %335 = vmatprep.subr.bf16.mxu0 0
        %336 = vmatpush2.bf16.msra.mxu0 0
        %337 = vmatprep.mubr.bf16.mxu0 0
        %338 = vmatmul.mubr.bf16.gmra.mxu0 %v296
        %v339 = vpop.f32.mrf.mxu0
        %v340 = vadd.f32 %v271, %v339
        %v341 = vpop.f32.mrf.mxu0
        %v342 = vpop.f32.mrf.mxu0
        %v343 = vpop.f32.mrf.mxu0
        %344 = vdwg.mxu0
        %vm345 = vcmp.ge.f32.partialorder %v340, 0.0
        %v346 = vmul.f32 %v340, 0.01
        %v347 = vsel %vm345, %v340, %v346
        %v348 = vld [vmem:[%s3] sm:$0x1]
        %v350 = vlaneseq
        %v351 = vshrl.u32 %v350, 7
        %v352 = vsub.s32 0, %v351
        %v353 = vrot.slane %v348, %v352
        %v355 = vmul.f32 %v347, %v353
        %vm356 = vcmask 523264
        %v357 = vsel %vm356, %v355, 0.0
        %358 = vadd.xlane.f32.xlu0 %v357
        %v359 = vpop.xlane.xlu0 %358
        %v360 = vld [vmem:[#allocation2] sm:$0x1]
        %362 = vset.pattern.permute.xlu0 0
        %363 = vperm.xlu0 %362, %v360
        %v364 = vpop.permute.xlu0 %363
        %v366 = vlaneseq
        %v367 = vshrl.u32 %v366, 7
        %v368 = vsub.s32 0, %v367
        %v369 = vrot.slane %v364, %v368
        %v370 = vadd.f32 %v359, %v369
        %v372 = vlaneseq
        %v373 = vand.u32 %v372, 127
        %v374 = vlaneseq
        %v375 = vshrl.u32 %v374, 7
        %v376 = vsub.s32 %v373, %v375
        %v377 = vrot.slane %v370, %v376
        %vm379 = vcmask 57344
        %380 = vst.msk [vmem:[%s255] sm:$0x1] %vm379, %v377
        %s381 = sand.u32 %s143, 1
        %s382 = scalar_lea.sflag [#allocation5], %s381
        %s383 = sand.u32 %s143, 1
        %s384 = scalar_lea.vmem [#allocation8], %s383
        // Predicated region
        $region49: #{tpu_custom_call.1} parent=39 // pred_check
          %p385 = pneg %p153
        $region50: #{tpu_custom_call.1} parent=39 // pred_check_branch
          %387 = sbr.rel (%p385) target = $region52
        $region51: #{tpu_custom_call.1} parent=39 // pred_region
          %s389 = ssub.s32 16, 16
          %390 = vsyncadd %s382, %s389
          %s391 = smul.addr %s25, 16
          %s392 = scalar_lea.hbm %s5, %s391
          %s394 = sshll.u32 %s384, 4
          %s395 = int_to_ptr.vmem [resolvable:$true] %s394
          %397 = dma.vmem_to_hbm [thread:$0]  %s395, 16, %s392, %s382
        $region52: #{tpu_custom_call.1} parent=39 // pred_fallthru
          _
      $region40: #{tpu_custom_call.1} parent=5 // pred_fallthru
        _
      %p398 = scmp.le.s32.totalorder 2, %s20
      // Predicated region
      $region53: #{tpu_custom_call.1} parent=5 // pred_check
        %p399 = pneg %p398
      $region54: #{tpu_custom_call.1} parent=5 // pred_check_branch
        %401 = sbr.rel (%p399) target = $region56
      $region55: #{tpu_custom_call.1} parent=5 // pred_region
        %s402 = ssub.s32 %s20, 2
        // Predicated region
        $region57: #{tpu_custom_call.1} parent=55 // pred_check
          %p403 = pneg %p159
        $region58: #{tpu_custom_call.1} parent=55 // pred_check_branch
          %405 = sbr.rel (%p403) target = $region60
        $region59: #{tpu_custom_call.1} parent=55 // pred_region
          %s406 = sand.u32 %s144, 1
          %s407 = scalar_lea.sflag [#allocation5], %s406
          %s408 = sand.u32 %s144, 1
          %s409 = scalar_lea.vmem [#allocation8], %s408
          %410 = dma.done %s407, 16
        $region60: #{tpu_custom_call.1} parent=55 // pred_fallthru
          _
      $region56: #{tpu_custom_call.1} parent=5 // pred_fallthru
        _
    $region6: #{tpu_custom_call.1} parent=1 // loop_footer
      %s24 = sadd.s32 1, %s20
    $region7: #{tpu_custom_call.1} parent=1 // loop_footer_branch
      %19 = sbr.rel target = $region3
    $region8: #{tpu_custom_call.1} parent=1 // loop_exit
      _
    %411 = vsyncpa [#allocation4], 1
    %s412 = scalar_lea.sflag [#allocation4], 1
    %413 = vsyncpa %s412, 1
    %414 = vsyncpa [#allocation7], 1
    %415 = vsyncpa [#allocation5], 1
    %s416 = scalar_lea.sflag [#allocation5], 1
    %417 = vsyncpa %s416, 1

</llo_original>
